<compile_context>
chip_gen: v7x
topology: tpu7x:2x2x1
jax: 0.10.0
libtpu: 0.0.40
codegen_flags: <defaults>
</compile_context>

<pallas_src>
import functools

import jax
import jax.numpy as jnp
from jax.experimental import pallas as pl
from jax.experimental.pallas import tpu as pltpu

STATE_DIM = 8
PARAM_DIM = 8
HIDDEN_DIM = 128
N_HIDDEN_LAYERS = 4
BN_EPS = 1e-5
OUT_PAD = 128  # lane-dense output width; real output is the first PARAM_DIM columns


# ----------------------------------------------------------------------------- kernel


def _mlp_kernel(x_ref, w_in_ref, b_in_ref, w_h_ref, b_h_ref, w_out_ref, b_out_ref,
                o_ref):
    """One batch tile of the fused MLP. All weights are VMEM-resident."""
    wdtype = w_in_ref.dtype   # MXU input dtype (bf16 on the fast path, f32 otherwise)
    edtype = b_in_ref.dtype   # element-wise dtype (bf16 on v6e/v7x fast path, else f32)

    # Input layer: single K=16 dot (wrapper already concatenated state||params).
    h = (jnp.dot(x_ref[...].astype(wdtype), w_in_ref[...],
                 preferred_element_type=jnp.float32).astype(edtype)
         + b_in_ref[...])
    h = jnp.maximum(h, 0.0)          # ReLU; dropout = identity in eval mode

    # 4 hidden layers, statically unrolled. Eval-mode BN is folded into w_h / b_h by
    # prepare_params, so each layer is just Linear + ReLU (+ residual from layer 1 on).
    for i in range(N_HIDDEN_LAYERS):
        residual = h
        z = (jnp.dot(h.astype(wdtype), w_h_ref[i],
                     preferred_element_type=jnp.float32).astype(edtype)
             + b_h_ref[i])
        z = jnp.maximum(z, 0.0)
        if i > 0:
            z = z + residual
        h = z

    # Output layer (zero-padded to 128 lanes for an unmasked, lane-dense store)
    # + sigmoid, computed in f32.
    out = (jnp.dot(h.astype(wdtype), w_out_ref[...],
                   preferred_element_type=jnp.float32)
           + b_out_ref[...])
    o_ref[...] = jax.nn.sigmoid(out).astype(o_ref.dtype)


# ------------------------------------------------------------------------ param utils


def init_params(key):
    """Deterministic raw parameters (PyTorch-Linear-style uniform bounds)."""
    ks = jax.random.split(key, 2 * (2 + N_HIDDEN_LAYERS))
    in_dim = STATE_DIM + PARAM_DIM

    def linear(kw, kb, fan_in, fan_out):
        bound = 1.0 / jnp.sqrt(fan_in)
        w = jax.random.uniform(kw, (fan_in, fan_out), jnp.float32, -bound, bound)
        b = jax.random.uniform(kb, (1, fan_out), jnp.float32, -bound, bound)
        return w, b

    w_in, b_in = linear(ks[0], ks[1], in_dim, HIDDEN_DIM)
    w_h, b_h = [], []
    for i in range(N_HIDDEN_LAYERS):
        w, b = linear(ks[2 + 2 * i], ks[3 + 2 * i], HIDDEN_DIM, HIDDEN_DIM)
        w_h.append(w)
        b_h.append(b[0])
    w_h = jnp.stack(w_h)                                          # (4, 128, 128)
    b_h = jnp.stack(b_h)                                          # (4, 128)
    w_out, b_out = linear(ks[-2], ks[-1], HIDDEN_DIM, PARAM_DIM)
    gamma = jnp.ones((N_HIDDEN_LAYERS, HIDDEN_DIM), jnp.float32)  # BN weight init = 1
    beta = jnp.zeros((N_HIDDEN_LAYERS, HIDDEN_DIM), jnp.float32)  # BN bias init = 0
    return dict(w_in=w_in, b_in=b_in, w_h=w_h, b_h=b_h,
                gamma=gamma, beta=beta, w_out=w_out, b_out=b_out)


def _device_kind():
    try:
        return jax.devices()[0].device_kind.lower()
    except Exception:  # pragma: no cover - defensive
        return ""


def _default_dtypes():
    """(MXU-input dtype, element-wise dtype) for the current chip.

    bf16 MXU inputs everywhere (f32 accumulation); bf16 element-wise only on chips
    with a bf16 VPU (v6e / v7x).  Unknown device -> conservative f32/f32.
    """
    kind = _device_kind()
    if ("v6" in kind) or ("v7" in kind):
        return jnp.bfloat16, jnp.bfloat16
    if "v5" in kind or "v4" in kind:
        return jnp.bfloat16, jnp.float32   # v5e MXU peak is a bf16 figure; VPU has no bf16
    return jnp.float32, jnp.float32


def prepare_params(p, *, apply_bn, compute_dtype=None, elem_dtype=None,
                   running_mean=None, running_var=None):
    """Fold eval-mode BN into the hidden Linears and pack kernel-ready arrays.

    apply_bn mirrors the PyTorch `if x.shape[0] > 1` branch (True for B > 1) and is
    re-checked against the actual batch size at call time.
    running_mean / running_var: optional (4, 128) BN running statistics; default is
    fresh PyTorch init (mean=0, var=1).
    """
    d_compute, d_elem = _default_dtypes()
    compute_dtype = compute_dtype if compute_dtype is not None else d_compute
    elem_dtype = elem_dtype if elem_dtype is not None else d_elem

    if apply_bn:
        mean = (running_mean if running_mean is not None
                else jnp.zeros((N_HIDDEN_LAYERS, HIDDEN_DIM), jnp.float32))
        var = (running_var if running_var is not None
               else jnp.ones((N_HIDDEN_LAYERS, HIDDEN_DIM), jnp.float32))
        scale = p["gamma"] * jax.lax.rsqrt(var + BN_EPS)          # (4, 128)
        w_h = p["w_h"] * scale[:, None, :]                        # (4, 128, 128)
        b_h = (p["b_h"] - mean) * scale + p["beta"]               # (4, 128)
    else:
        w_h, b_h = p["w_h"], p["b_h"]

    # Zero-pad the output projection to 128 lanes (lane-dense matmul + store).
    w_out_p = jnp.zeros((HIDDEN_DIM, OUT_PAD), jnp.float32).at[:, :PARAM_DIM].set(p["w_out"])
    b_out_p = jnp.zeros((1, OUT_PAD), jnp.float32).at[:, :PARAM_DIM].set(p["b_out"])

    return dict(
        apply_bn=bool(apply_bn),                                  # checked at call time
        w_in=p["w_in"].astype(compute_dtype),                     # (16, 128)
        b_in=p["b_in"].astype(elem_dtype),                        # (1, 128)
        w_h=w_h.astype(compute_dtype),                            # (4, 128, 128)
        b_h=b_h[:, None, :].astype(elem_dtype),                   # (4, 1, 128)
        w_out=w_out_p.astype(compute_dtype),                      # (128, 128)
        b_out=b_out_p.astype(jnp.float32),                        # (1, 128), f32 output math
    )


# --------------------------------------------------------------------------- wrapper


def _round_up(x, m):
    return ((x + m - 1) // m) * m


def _choose_tile_b(B, max_tile_b=1024):
    """Largest batch tile (<= max_tile_b), with >= 2*num_TC tiles on multi-TC chips."""
    n_tc = 2 if "v7" in _device_kind() else 1
    tb = min(max_tile_b, B)
    if n_tc > 1 and B > 8 * 2 * n_tc:
        tb = min(tb, _round_up(pl.cdiv(B, 2 * n_tc), 8))
    return tb


def _finalize_tile(B, tile_b):
    tb = max(1, min(int(tile_b), B))
    if tb < B:
        tb = _round_up(tb, 8)           # (8,128) sublane constraint for partial tiling
        if tb >= B:
            tb = B
    return tb


def _resident(shape):
    """Full-array BlockSpec with a constant index_map -> stays VMEM-resident."""
    zeros = (0,) * len(shape)
    return pl.BlockSpec(shape, lambda i, _z=zeros: _z)


@functools.partial(jax.jit, static_argnames=("tile_b",))
def _forward_impl(state, current_params, params, *, tile_b):
    # Merge the two tiny inputs into one streamed (B, 16) array: one DMA per tile.
    x = jnp.concatenate([state.astype(jnp.float32),
                         current_params.astype(jnp.float32)], axis=-1)
    B = x.shape[0]
    tb = tile_b
    grid = (pl.cdiv(B, tb),)

    itemsize = jnp.dtype(params["w_h"].dtype).itemsize
    weight_bytes = ((STATE_DIM + PARAM_DIM) * HIDDEN_DIM
                    + N_HIDDEN_LAYERS * HIDDEN_DIM * HIDDEN_DIM
                    + HIDDEN_DIM * OUT_PAD) * itemsize
    cost = pl.CostEstimate(
        flops=2 * B * ((STATE_DIM + PARAM_DIM) * HIDDEN_DIM
                       + N_HIDDEN_LAYERS * HIDDEN_DIM * HIDDEN_DIM
                       + HIDDEN_DIM * OUT_PAD),
        transcendentals=B * OUT_PAD,
        bytes_accessed=B * (STATE_DIM + PARAM_DIM) * 4 + B * OUT_PAD * 4 + weight_bytes,
    )

    out_padded = pl.pallas_call(
        _mlp_kernel,
        out_shape=jax.ShapeDtypeStruct((B, OUT_PAD), jnp.float32),
        grid=grid,
        in_specs=[
            pl.BlockSpec((tb, STATE_DIM + PARAM_DIM), lambda i: (i, 0)),  # streamed x
            _resident(params["w_in"].shape),
            _resident(params["b_in"].shape),
            _resident(params["w_h"].shape),
            _resident(params["b_h"].shape),
            _resident(params["w_out"].shape),
            _resident(params["b_out"].shape),
        ],
        out_specs=pl.BlockSpec((tb, OUT_PAD), lambda i: (i, 0)),
        compiler_params=pltpu.CompilerParams(
            dimension_semantics=("parallel",)),                    # megacore on v7x
        cost_estimate=cost,
    )(x, params["w_in"], params["b_in"], params["w_h"], params["b_h"],
      params["w_out"], params["b_out"])

    return out_padded[:, :PARAM_DIM]


def adaptive_nn_forward(state, current_params, prepared, *, tile_b=None):
    """state: (B, 8), current_params: (B, 8); prepared from prepare_params()."""
    B = state.shape[0]
    apply_bn = prepared.get("apply_bn", None)
    if apply_bn is not None and apply_bn != (B > 1):
        raise ValueError(
            f"prepared params were built with apply_bn={apply_bn}, but batch size {B} "
            f"implies apply_bn={B > 1} (PyTorch `if x.shape[0] > 1` branch).")
    params = {k: v for k, v in prepared.items() if k != "apply_bn"}
    if tile_b is None:
        tile_b = _choose_tile_b(B)
    tb = _finalize_tile(B, tile_b)
    return _forward_impl(state, current_params, params, tile_b=tb)


# ------------------------------------------------------------------------- reference


def _reference_forward(state, current_params, p, *, apply_bn,
                       running_mean=None, running_var=None):
    """Pure-JAX mirror of the PyTorch module (eval mode)."""
    x = jnp.concatenate([state, current_params], axis=-1)
    h = jnp.maximum(x @ p["w_in"] + p["b_in"], 0.0)
    mean = (running_mean if running_mean is not None
            else jnp.zeros((N_HIDDEN_LAYERS, HIDDEN_DIM), jnp.float32))
    var = (running_var if running_var is not None
           else jnp.ones((N_HIDDEN_LAYERS, HIDDEN_DIM), jnp.float32))
    for i in range(N_HIDDEN_LAYERS):
        r = h
        z = h @ p["w_h"][i] + p["b_h"][i]
        if apply_bn:
            z = (z - mean[i]) * jax.lax.rsqrt(var[i] + BN_EPS) * p["gamma"][i] + p["beta"][i]
        z = jnp.maximum(z, 0.0)
        if i > 0:
            z = z + r
        h = z
    return jax.nn.sigmoid(h @ p["w_out"] + p["b_out"])


# ------------------------------------------------------------------------------ main


if __name__ == "__main__":
    key = jax.random.PRNGKey(0)
    k_params, k_state, k_cur, k_rm, k_rv = jax.random.split(key, 5)
    raw = init_params(k_params)

    # --- exactness checks on an explicit f32/f32 path -------------------------------
    prep_f32 = prepare_params(raw, apply_bn=True,
                              compute_dtype=jnp.float32, elem_dtype=jnp.float32)

    # Small batch (B=4).
    B = 4
    state = jax.random.normal(k_state, (B, STATE_DIM), jnp.float32)
    cur = jax.random.uniform(k_cur, (B, PARAM_DIM), jnp.float32)
    out = jax.block_until_ready(adaptive_nn_forward(state, cur, prep_f32))
    ref = _reference_forward(state, cur, raw, apply_bn=True)
    assert out.shape == (B, PARAM_DIM)
    assert jnp.allclose(out, ref, atol=1e-5, rtol=1e-5), "mismatch vs reference (B=4)"

    # B == 1 takes the no-BatchNorm branch of the PyTorch forward.
    prep_nobn = prepare_params(raw, apply_bn=False,
                               compute_dtype=jnp.float32, elem_dtype=jnp.float32)
    out1 = jax.block_until_ready(adaptive_nn_forward(state[:1], cur[:1], prep_nobn))
    ref1 = _reference_forward(state[:1], cur[:1], raw, apply_bn=False)
    assert jnp.allclose(out1, ref1, atol=1e-5, rtol=1e-5), "mismatch vs reference (B=1)"

    # Ragged batch (B not a multiple of the tile) -> exercises the masked partial tile.
    Br = 100
    kr1, kr2 = jax.random.split(jax.random.PRNGKey(2))
    state_r = jax.random.normal(kr1, (Br, STATE_DIM), jnp.float32)
    cur_r = jax.random.uniform(kr2, (Br, PARAM_DIM), jnp.float32)
    out_r = jax.block_until_ready(
        adaptive_nn_forward(state_r, cur_r, prep_f32, tile_b=64))
    ref_r = _reference_forward(state_r, cur_r, raw, apply_bn=True)
    assert jnp.allclose(out_r, ref_r, atol=1e-5, rtol=1e-5), "mismatch (ragged B=100)"

    # Non-trivial BN running statistics folded into the hidden Linears.
    rmean = 0.1 * jax.random.normal(k_rm, (N_HIDDEN_LAYERS, HIDDEN_DIM), jnp.float32)
    rvar = 1.0 + 0.2 * jax.random.uniform(k_rv, (N_HIDDEN_LAYERS, HIDDEN_DIM), jnp.float32)
    prep_stats = prepare_params(raw, apply_bn=True,
                                compute_dtype=jnp.float32, elem_dtype=jnp.float32,
                                running_mean=rmean, running_var=rvar)
    out_s = jax.block_until_ready(adaptive_nn_forward(state, cur, prep_stats))
    ref_s = _reference_forward(state, cur, raw, apply_bn=True,
                               running_mean=rmean, running_var=rvar)
    assert jnp.allclose(out_s, ref_s, atol=1e-5, rtol=1e-5), "mismatch (running stats)"

    # --- default fast path: bf16 MXU inputs, device-appropriate element-wise dtype ---
    Bb = 512
    kb1, kb2 = jax.random.split(jax.random.PRNGKey(1))
    state_b = jax.random.normal(kb1, (Bb, STATE_DIM), jnp.float32)
    cur_b = jax.random.uniform(kb2, (Bb, PARAM_DIM), jnp.float32)
    prep_fast = prepare_params(raw, apply_bn=True)            # default (bf16) dtypes
    out_b = jax.block_until_ready(adaptive_nn_forward(state_b, cur_b, prep_fast))
    ref_b = _reference_forward(state_b, cur_b, raw, apply_bn=True)
    tol = 5e-2 if prep_fast["w_h"].dtype == jnp.bfloat16 else 1e-5
    assert jnp.allclose(out_b, ref_b, atol=tol, rtol=tol), "mismatch (default fast path)"

    print("KERNEL_OK")
</pallas_src>

<mosaic_0001>
module attributes {stable_mosaic.version = 11 : i64} {
  func.func @_mlp_kernel(%arg0: i32, %arg1: memref<4x16xf32, #tpu.memory_space<vmem>>, %arg2: memref<16x128xf32, #tpu.memory_space<vmem>>, %arg3: memref<1x128xf32, #tpu.memory_space<vmem>>, %arg4: memref<4x128x128xf32, #tpu.memory_space<vmem>>, %arg5: memref<4x1x128xf32, #tpu.memory_space<vmem>>, %arg6: memref<128x128xf32, #tpu.memory_space<vmem>>, %arg7: memref<1x128xf32, #tpu.memory_space<vmem>>, %arg8: memref<4x128xf32, #tpu.memory_space<vmem>>) attributes {dimension_semantics = [#tpu.dimension_semantics<parallel>], iteration_bounds = array<i64: 1>, scalar_prefetch = 0 : i64, scratch_operands = 0 : i64, tpu.core_type = #tpu.core_type<tc>, window_params = [{transform_indices = @transform_0, window_bounds = array<i64: 4, 16>}, {pipeline_mode = #tpu.pipeline_mode<synchronous>, transform_indices = @transform_1, window_bounds = array<i64: 16, 128>}, {pipeline_mode = #tpu.pipeline_mode<synchronous>, transform_indices = @transform_2, window_bounds = array<i64: 1, 128>}, {pipeline_mode = #tpu.pipeline_mode<synchronous>, transform_indices = @transform_3, window_bounds = array<i64: 4, 128, 128>}, {pipeline_mode = #tpu.pipeline_mode<synchronous>, transform_indices = @transform_4, window_bounds = array<i64: 4, 1, 128>}, {pipeline_mode = #tpu.pipeline_mode<synchronous>, transform_indices = @transform_5, window_bounds = array<i64: 128, 128>}, {pipeline_mode = #tpu.pipeline_mode<synchronous>, transform_indices = @transform_6, window_bounds = array<i64: 1, 128>}, {transform_indices = @transform_7, window_bounds = array<i64: 4, 128>}]} {
    %c0 = arith.constant 0 : index
    %c0_0 = arith.constant 0 : index
    %0 = vector.load %arg1[%c0, %c0_0] : memref<4x16xf32, #tpu.memory_space<vmem>>, vector<4x16xf32>
    %c0_1 = arith.constant 0 : index
    %c0_2 = arith.constant 0 : index
    %1 = vector.load %arg2[%c0_1, %c0_2] : memref<16x128xf32, #tpu.memory_space<vmem>>, vector<16x128xf32>
    %cst = arith.constant dense<0.000000e+00> : vector<4x128xf32>
    %2 = tpu.matmul %0, %1, %cst {dimension_numbers = #tpu.dot_dimension_numbers<[1], [0], [0], [1], [0, 0, 1, 1], [], []>} : vector<4x16xf32>, vector<16x128xf32>, vector<4x128xf32> -> vector<4x128xf32>
    %c0_3 = arith.constant 0 : index
    %c0_4 = arith.constant 0 : index
    %3 = vector.load %arg3[%c0_3, %c0_4] : memref<1x128xf32, #tpu.memory_space<vmem>>, vector<1x128xf32>
    %4 = vector.broadcast %3 : vector<1x128xf32> to vector<4x128xf32>
    %5 = arith.addf %2, %4 : vector<4x128xf32>
    %cst_5 = arith.constant 0.000000e+00 : f32
    %6 = vector.broadcast %cst_5 : f32 to vector<4x128xf32>
    %7 = arith.maximumf %5, %6 : vector<4x128xf32>
    %c0_6 = arith.constant 0 : index
    %c0_7 = arith.constant 0 : index
    %c0_8 = arith.constant 0 : index
    %8 = vector.load %arg4[%c0_6, %c0_7, %c0_8] : memref<4x128x128xf32, #tpu.memory_space<vmem>>, vector<1x128x128xf32>
    %9 = vector.shape_cast %8 : vector<1x128x128xf32> to vector<128x128xf32>
    %cst_9 = arith.constant dense<0.000000e+00> : vector<4x128xf32>
    %10 = tpu.matmul %7, %9, %cst_9 {dimension_numbers = #tpu.dot_dimension_numbers<[1], [0], [0], [1], [0, 0, 1, 1], [], []>} : vector<4x128xf32>, vector<128x128xf32>, vector<4x128xf32> -> vector<4x128xf32>
    %c0_10 = arith.constant 0 : index
    %c0_11 = arith.constant 0 : index
    %c0_12 = arith.constant 0 : index
    %11 = vector.load %arg5[%c0_10, %c0_11, %c0_12] : memref<4x1x128xf32, #tpu.memory_space<vmem>>, vector<1x1x128xf32>
    %12 = vector.shape_cast %11 : vector<1x1x128xf32> to vector<1x128xf32>
    %13 = vector.broadcast %12 : vector<1x128xf32> to vector<4x128xf32>
    %14 = arith.addf %10, %13 : vector<4x128xf32>
    %cst_13 = arith.constant 0.000000e+00 : f32
    %15 = vector.broadcast %cst_13 : f32 to vector<4x128xf32>
    %16 = arith.maximumf %14, %15 : vector<4x128xf32>
    %c1 = arith.constant 1 : index
    %c0_14 = arith.constant 0 : index
    %c0_15 = arith.constant 0 : index
    %17 = vector.load %arg4[%c1, %c0_14, %c0_15] : memref<4x128x128xf32, #tpu.memory_space<vmem>>, vector<1x128x128xf32>
    %18 = vector.shape_cast %17 : vector<1x128x128xf32> to vector<128x128xf32>
    %cst_16 = arith.constant dense<0.000000e+00> : vector<4x128xf32>
    %19 = tpu.matmul %16, %18, %cst_16 {dimension_numbers = #tpu.dot_dimension_numbers<[1], [0], [0], [1], [0, 0, 1, 1], [], []>} : vector<4x128xf32>, vector<128x128xf32>, vector<4x128xf32> -> vector<4x128xf32>
    %c1_17 = arith.constant 1 : index
    %c0_18 = arith.constant 0 : index
    %c0_19 = arith.constant 0 : index
    %20 = vector.load %arg5[%c1_17, %c0_18, %c0_19] : memref<4x1x128xf32, #tpu.memory_space<vmem>>, vector<1x1x128xf32>
    %21 = vector.shape_cast %20 : vector<1x1x128xf32> to vector<1x128xf32>
    %22 = vector.broadcast %21 : vector<1x128xf32> to vector<4x128xf32>
    %23 = arith.addf %19, %22 : vector<4x128xf32>
    %cst_20 = arith.constant 0.000000e+00 : f32
    %24 = vector.broadcast %cst_20 : f32 to vector<4x128xf32>
    %25 = arith.maximumf %23, %24 : vector<4x128xf32>
    %26 = arith.addf %25, %16 : vector<4x128xf32>
    %c2 = arith.constant 2 : index
    %c0_21 = arith.constant 0 : index
    %c0_22 = arith.constant 0 : index
    %27 = vector.load %arg4[%c2, %c0_21, %c0_22] : memref<4x128x128xf32, #tpu.memory_space<vmem>>, vector<1x128x128xf32>
    %28 = vector.shape_cast %27 : vector<1x128x128xf32> to vector<128x128xf32>
    %cst_23 = arith.constant dense<0.000000e+00> : vector<4x128xf32>
    %29 = tpu.matmul %26, %28, %cst_23 {dimension_numbers = #tpu.dot_dimension_numbers<[1], [0], [0], [1], [0, 0, 1, 1], [], []>} : vector<4x128xf32>, vector<128x128xf32>, vector<4x128xf32> -> vector<4x128xf32>
    %c2_24 = arith.constant 2 : index
    %c0_25 = arith.constant 0 : index
    %c0_26 = arith.constant 0 : index
    %30 = vector.load %arg5[%c2_24, %c0_25, %c0_26] : memref<4x1x128xf32, #tpu.memory_space<vmem>>, vector<1x1x128xf32>
    %31 = vector.shape_cast %30 : vector<1x1x128xf32> to vector<1x128xf32>
    %32 = vector.broadcast %31 : vector<1x128xf32> to vector<4x128xf32>
    %33 = arith.addf %29, %32 : vector<4x128xf32>
    %cst_27 = arith.constant 0.000000e+00 : f32
    %34 = vector.broadcast %cst_27 : f32 to vector<4x128xf32>
    %35 = arith.maximumf %33, %34 : vector<4x128xf32>
    %36 = arith.addf %35, %26 : vector<4x128xf32>
    %c3 = arith.constant 3 : index
    %c0_28 = arith.constant 0 : index
    %c0_29 = arith.constant 0 : index
    %37 = vector.load %arg4[%c3, %c0_28, %c0_29] : memref<4x128x128xf32, #tpu.memory_space<vmem>>, vector<1x128x128xf32>
    %38 = vector.shape_cast %37 : vector<1x128x128xf32> to vector<128x128xf32>
    %cst_30 = arith.constant dense<0.000000e+00> : vector<4x128xf32>
    %39 = tpu.matmul %36, %38, %cst_30 {dimension_numbers = #tpu.dot_dimension_numbers<[1], [0], [0], [1], [0, 0, 1, 1], [], []>} : vector<4x128xf32>, vector<128x128xf32>, vector<4x128xf32> -> vector<4x128xf32>
    %c3_31 = arith.constant 3 : index
    %c0_32 = arith.constant 0 : index
    %c0_33 = arith.constant 0 : index
    %40 = vector.load %arg5[%c3_31, %c0_32, %c0_33] : memref<4x1x128xf32, #tpu.memory_space<vmem>>, vector<1x1x128xf32>
    %41 = vector.shape_cast %40 : vector<1x1x128xf32> to vector<1x128xf32>
    %42 = vector.broadcast %41 : vector<1x128xf32> to vector<4x128xf32>
    %43 = arith.addf %39, %42 : vector<4x128xf32>
    %cst_34 = arith.constant 0.000000e+00 : f32
    %44 = vector.broadcast %cst_34 : f32 to vector<4x128xf32>
    %45 = arith.maximumf %43, %44 : vector<4x128xf32>
    %46 = arith.addf %45, %36 : vector<4x128xf32>
    %c0_35 = arith.constant 0 : index
    %c0_36 = arith.constant 0 : index
    %47 = vector.load %arg6[%c0_35, %c0_36] : memref<128x128xf32, #tpu.memory_space<vmem>>, vector<128x128xf32>
    %cst_37 = arith.constant dense<0.000000e+00> : vector<4x128xf32>
    %48 = tpu.matmul %46, %47, %cst_37 {dimension_numbers = #tpu.dot_dimension_numbers<[1], [0], [0], [1], [0, 0, 1, 1], [], []>} : vector<4x128xf32>, vector<128x128xf32>, vector<4x128xf32> -> vector<4x128xf32>
    %c0_38 = arith.constant 0 : index
    %c0_39 = arith.constant 0 : index
    %49 = vector.load %arg7[%c0_38, %c0_39] : memref<1x128xf32, #tpu.memory_space<vmem>>, vector<1x128xf32>
    %50 = vector.broadcast %49 : vector<1x128xf32> to vector<4x128xf32>
    %51 = arith.addf %48, %50 : vector<4x128xf32>
    %52 = arith.negf %51 : vector<4x128xf32>
    %53 = math.exp %52 : vector<4x128xf32>
    %cst_40 = arith.constant 1.000000e+00 : f32
    %54 = vector.broadcast %cst_40 : f32 to vector<4x128xf32>
    %55 = arith.addf %54, %53 : vector<4x128xf32>
    %56 = arith.divf %54, %55 : vector<4x128xf32>
    %c0_41 = arith.constant 0 : index
    %c0_42 = arith.constant 0 : index
    %57 = vector.load %arg8[%c0_41, %c0_42] : memref<4x128xf32, #tpu.memory_space<vmem>>, vector<4x128xf32>
    tpu.vector_store %arg8[%c0_41, %c0_42], %56 {strides = array<i32>} : memref<4x128xf32, #tpu.memory_space<vmem>>, vector<4x128xf32>,
    return
  }
  func.func @transform_0(%arg0: i32) -> (i32, i32) {
    %c0_i32 = arith.constant 0 : i32
    %c0_i32_0 = arith.constant 0 : i32
    return %arg0, %c0_i32 : i32, i32
  }
  func.func @transform_1(%arg0: i32) -> (i32, i32) {
    %c0_i32 = arith.constant 0 : i32
    %c0_i32_0 = arith.constant 0 : i32
    %c0_i32_1 = arith.constant 0 : i32
    return %c0_i32, %c0_i32_0 : i32, i32
  }
  func.func @transform_2(%arg0: i32) -> (i32, i32) {
    %c0_i32 = arith.constant 0 : i32
    %c0_i32_0 = arith.constant 0 : i32
    %c0_i32_1 = arith.constant 0 : i32
    return %c0_i32, %c0_i32_0 : i32, i32
  }
  func.func @transform_3(%arg0: i32) -> (i32, i32, i32) {
    %c0_i32 = arith.constant 0 : i32
    %c0_i32_0 = arith.constant 0 : i32
    %c0_i32_1 = arith.constant 0 : i32
    %c0_i32_2 = arith.constant 0 : i32
    return %c0_i32, %c0_i32_0, %c0_i32_1 : i32, i32, i32
  }
  func.func @transform_4(%arg0: i32) -> (i32, i32, i32) {
    %c0_i32 = arith.constant 0 : i32
    %c0_i32_0 = arith.constant 0 : i32
    %c0_i32_1 = arith.constant 0 : i32
    %c0_i32_2 = arith.constant 0 : i32
    return %c0_i32, %c0_i32_0, %c0_i32_1 : i32, i32, i32
  }
  func.func @transform_5(%arg0: i32) -> (i32, i32) {
    %c0_i32 = arith.constant 0 : i32
    %c0_i32_0 = arith.constant 0 : i32
    %c0_i32_1 = arith.constant 0 : i32
    return %c0_i32, %c0_i32_0 : i32, i32
  }
  func.func @transform_6(%arg0: i32) -> (i32, i32) {
    %c0_i32 = arith.constant 0 : i32
    %c0_i32_0 = arith.constant 0 : i32
    %c0_i32_1 = arith.constant 0 : i32
    return %c0_i32, %c0_i32_0 : i32, i32
  }
  func.func @transform_7(%arg0: i32) -> (i32, i32) {
    %c0_i32 = arith.constant 0 : i32
    %c0_i32_0 = arith.constant 0 : i32
    return %arg0, %c0_i32 : i32, i32
  }
}

</mosaic_0001>

<llo_original>
// kernel: _forward_impl.1
$region0: #{_forward_impl.1}
  #allocation0 [shape = 'u32[]', space=smem, size = 0x4, offset = 0x4, fixed_abs, tag = 'smem constant byte address 0x4 - core index']
  #allocation1 [shape = 'u32[144,128]{1,0:T(1,128)}', space=vmem, size = 0x12000, scoped, tag = 'internal scratch']
  %s0 = inlined_call_operand.vmem [shape: f32[4,16], index: 0, kind: input, shape index: {}]
  %s1 = inlined_call_operand.vmem [shape: f32[16,128], index: 1, kind: input, shape index: {}]
  %s2 = inlined_call_operand.vmem [shape: f32[1,128], index: 2, kind: input, shape index: {}]
  %s3 = inlined_call_operand.hbm [shape: f32[4,128,128], index: 3, kind: input, shape index: {}]
  %s4 = inlined_call_operand.vmem [shape: f32[4,1,128], index: 4, kind: input, shape index: {}]
  %s5 = inlined_call_operand.hbm [shape: f32[128,128], index: 5, kind: input, shape index: {}]
  %s6 = inlined_call_operand.vmem [shape: f32[1,128], index: 6, kind: input, shape index: {}]
  %s7 = inlined_call_operand.hbm [shape: f32[4,128], index: 7, kind: output, shape index: {}]
  %s8 = sld [smem:[#allocation0]]
  $region46: #{_forward_impl.1} parent=0
    _
  %s10 = ssub.s32 1, %s8
  %s11 = scalar_select 0, %s10, %s8
  $region1: #{_forward_impl.1} parent=0
    #allocation2 [shape = 'u8[262144]{0}', space=vmem, size = 0x40000, scoped, tag = 'input window, operand 3, single buffered']
    #allocation3 [shape = 's32[1]{0}', space=sflag, size = 0x4, scoped, tag = 'scoped memory for _forward_impl.1']
    #allocation4 [shape = 's32[1]{0}', space=sflag, size = 0x4, scoped, tag = 'scoped memory for _forward_impl.1']
    #allocation5 [shape = 'u8[65536]{0}', space=vmem, size = 0x10000, scoped, tag = 'input window, operand 5, single buffered']
    #allocation6 [shape = 's32[1]{0}', space=sflag, size = 0x4, scoped, tag = 'scoped memory for _forward_impl.1']
    #allocation7 [shape = 'u8[2048]{0}', space=vmem, size = 0x800, scoped, tag = 'output window, operand 0, single buffered']
    %12 = vsyncpa [#allocation3], 0
    %13 = vsyncpa [#allocation6], 0
    %14 = vsyncpa [#allocation4], 0
    // Predicated region
    $region2: #{_forward_impl.1} parent=1 // pred_check
      _
    $region3: #{_forward_impl.1} parent=1 // pred_check_branch
      %16 = sbr.rel (0) target = $region5
    $region4: #{_forward_impl.1} parent=1 // pred_region
      _
    $region5: #{_forward_impl.1} parent=1 // pred_fallthru
      _
    // Predicated region
    $region6: #{_forward_impl.1} parent=1 // pred_check
      _
    $region7: #{_forward_impl.1} parent=1 // pred_check_branch
      %18 = sbr.rel (0) target = $region9
    $region8: #{_forward_impl.1} parent=1 // pred_region
      _
    $region9: #{_forward_impl.1} parent=1 // pred_fallthru
      _
    // Predicated region
    $region10: #{_forward_impl.1} parent=1 // pred_check
      _
    $region11: #{_forward_impl.1} parent=1 // pred_check_branch
      %20 = sbr.rel (0) target = $region13
    $region12: #{_forward_impl.1} parent=1 // pred_region
      _
    $region13: #{_forward_impl.1} parent=1 // pred_fallthru
      _
    // Predicated region
    $region14: #{_forward_impl.1} parent=1 // pred_check
      _
    $region15: #{_forward_impl.1} parent=1 // pred_check_branch
      %22 = sbr.rel (0) target = $region17
    $region16: #{_forward_impl.1} parent=1 // pred_region
      %s24 = ssub.s32 8192, 8192
      %25 = vsyncadd [#allocation3], %s24
      %s26 = sshll.u32 [#allocation2], 4
      %s27 = int_to_ptr.vmem [resolvable:$true] %s26
      %32 = dma.hbm_to_vmem [thread:$0]  %s3, 8192, %s27, [#allocation3], 128, 128, 8
    $region17: #{_forward_impl.1} parent=1 // pred_fallthru
      _
    // Predicated region
    $region18: #{_forward_impl.1} parent=1 // pred_check
      _
    $region19: #{_forward_impl.1} parent=1 // pred_check_branch
      %34 = sbr.rel (0) target = $region21
    $region20: #{_forward_impl.1} parent=1 // pred_region
      _
    $region21: #{_forward_impl.1} parent=1 // pred_fallthru
      _
    // Predicated region
    $region22: #{_forward_impl.1} parent=1 // pred_check
      _
    $region23: #{_forward_impl.1} parent=1 // pred_check_branch
      %36 = sbr.rel (0) target = $region25
    $region24: #{_forward_impl.1} parent=1 // pred_region
      %s38 = ssub.s32 2048, 2048
      %39 = vsyncadd [#allocation6], %s38
      %s40 = sshll.u32 [#allocation5], 4
      %s41 = int_to_ptr.vmem [resolvable:$true] %s40
      %46 = dma.hbm_to_vmem [thread:$0]  %s5, 2048, %s41, [#allocation6], 128, 128, 8
    $region25: #{_forward_impl.1} parent=1 // pred_fallthru
      _
    // Predicated region
    $region26: #{_forward_impl.1} parent=1 // pred_check
      _
    $region27: #{_forward_impl.1} parent=1 // pred_check_branch
      %48 = sbr.rel (0) target = $region29
    $region28: #{_forward_impl.1} parent=1 // pred_region
      _
    $region29: #{_forward_impl.1} parent=1 // pred_fallthru
      _
    // Predicated region
    $region30: #{_forward_impl.1} parent=1 // pred_check
      _
    $region31: #{_forward_impl.1} parent=1 // pred_check_branch
      %50 = sbr.rel (0) target = $region33
    $region32: #{_forward_impl.1} parent=1 // pred_region
      %51 = dma.done [#allocation3], 8192
    $region33: #{_forward_impl.1} parent=1 // pred_fallthru
      _
    // Predicated region
    $region34: #{_forward_impl.1} parent=1 // pred_check
      _
    $region35: #{_forward_impl.1} parent=1 // pred_check_branch
      %53 = sbr.rel (0) target = $region37
    $region36: #{_forward_impl.1} parent=1 // pred_region
      %54 = dma.done [#allocation6], 2048
    $region37: #{_forward_impl.1} parent=1 // pred_fallthru
      _
    %v55 = vld [vmem:[%s0] sm:$0xf]
    %v56 = vld [vmem:[%s1] sm:$0xff]
    %v57 = vld [vmem:[%s1 + $0x8] sm:$0xff]
    %v58 = vld [vmem:[%s2] sm:$0x1]
    %v60 = vlaneseq
    %v61 = vshrl.u32 %v60, 7
    %v62 = vsub.s32 0, %v61
    %v63 = vrot.slane %v58, %v62
    %vm65 = vcmask 130048
    %v67 = vsel %vm65, %v55, 0
    %69 = vmatprep.subr.mxu0 0.0
    %70 = vmatpush1.msra.mxu0 %v56
    %71 = vmatprep.subr.mxu0 0.0
    %72 = vmatpush1.msra.mxu0 %v57
    %73 = vmatprep.subr.mxu0 0.0
    %74 = vmatpush1.msra.mxu0 0.0
    %75 = vmatprep.subr.mxu0 0.0
    %76 = vmatpush1.msra.mxu0 0.0
    %77 = vmatprep.subr.mxu0 0.0
    %78 = vmatpush1.msra.mxu0 0.0
    %79 = vmatprep.subr.mxu0 0.0
    %80 = vmatpush1.msra.mxu0 0.0
    %81 = vmatprep.subr.mxu0 0.0
    %82 = vmatpush1.msra.mxu0 0.0
    %83 = vmatprep.subr.mxu0 0.0
    %84 = vmatpush1.msra.mxu0 0.0
    %85 = vmatprep.subr.mxu0 0.0
    %86 = vmatpush1.msra.mxu0 0.0
    %87 = vmatprep.subr.mxu0 0.0
    %88 = vmatpush1.msra.mxu0 0.0
    %89 = vmatprep.subr.mxu0 0.0
    %90 = vmatpush1.msra.mxu0 0.0
    %91 = vmatprep.subr.mxu0 0.0
    %92 = vmatpush1.msra.mxu0 0.0
    %93 = vmatprep.subr.mxu0 0.0
    %94 = vmatpush1.msra.mxu0 0.0
    %95 = vmatprep.subr.mxu0 0.0
    %96 = vmatpush1.msra.mxu0 0.0
    %97 = vmatprep.subr.mxu0 0.0
    %98 = vmatpush1.msra.mxu0 0.0
    %99 = vmatprep.subr.mxu0 0.0
    %100 = vmatpush1.msra.mxu0 0.0
    %101 = vmatprep.subr.mxu0 0.0
    %102 = vmatpush1.msra.mxu0 0.0
    %103 = vmatprep.subr.mxu0 0.0
    %104 = vmatpush1.msra.mxu0 0.0
    %105 = vmatprep.subr.mxu0 0.0
    %106 = vmatpush1.msra.mxu0 0.0
    %107 = vmatprep.subr.mxu0 0.0
    %108 = vmatpush1.msra.mxu0 0.0
    %109 = vmatprep.subr.mxu0 0.0
    %110 = vmatpush1.msra.mxu0 0.0
    %111 = vmatprep.subr.mxu0 0.0
    %112 = vmatpush1.msra.mxu0 0.0
    %113 = vmatprep.subr.mxu0 0.0
    %114 = vmatpush1.msra.mxu0 0.0
    %115 = vmatprep.subr.mxu0 0.0
    %116 = vmatpush1.msra.mxu0 0.0
    %117 = vmatprep.subr.mxu0 0.0
    %118 = vmatpush1.msra.mxu0 0.0
    %119 = vmatprep.subr.mxu0 0.0
    %120 = vmatpush1.msra.mxu0 0.0
    %121 = vmatprep.subr.mxu0 0.0
    %122 = vmatpush1.msra.mxu0 0.0
    %123 = vmatprep.subr.mxu0 0.0
    %124 = vmatpush1.msra.mxu0 0.0
    %125 = vmatprep.subr.mxu0 0.0
    %126 = vmatpush1.msra.mxu0 0.0
    %127 = vmatprep.subr.mxu0 0.0
    %128 = vmatpush1.msra.mxu0 0.0
    %129 = vmatprep.subr.mxu0 0.0
    %130 = vmatpush1.msra.mxu0 0.0
    %131 = vmatprep.subr.mxu0 0.0
    %132 = vmatpush1.msra.mxu0 0.0
    %133 = vmatprep.mubr.f32.mxu0 0.0
    %134 = vmatmul.mubr.f32.gmra.mrb[0].mxu0 %v67
    %v135 = vpop.f32.mrb[0].mxu0
    %v136 = vadd.f32 %v63, %v135
    %v137 = vpop.f32.mrb[0].mxu0
    %138 = vdwg.mxu0
    %v139 = vmax.f32 %v136, 0.0
    %v140 = vld [vmem:[#allocation2] sm:$0xff]
    %v141 = vld [vmem:[#allocation2 + $0x8] sm:$0xff]
    %v142 = vld [vmem:[#allocation2 + $0x10] sm:$0xff]
    %v143 = vld [vmem:[#allocation2 + $0x18] sm:$0xff]
    %v144 = vld [vmem:[#allocation2 + $0x20] sm:$0xff]
    %v145 = vld [vmem:[#allocation2 + $0x28] sm:$0xff]
    %v146 = vld [vmem:[#allocation2 + $0x30] sm:$0xff]
    %v147 = vld [vmem:[#allocation2 + $0x38] sm:$0xff]
    %v148 = vld [vmem:[#allocation2 + $0x40] sm:$0xff]
    %v149 = vld [vmem:[#allocation2 + $0x48] sm:$0xff]
    %v150 = vld [vmem:[#allocation2 + $0x50] sm:$0xff]
    %v151 = vld [vmem:[#allocation2 + $0x58] sm:$0xff]
    %v152 = vld [vmem:[#allocation2 + $0x60] sm:$0xff]
    %v153 = vld [vmem:[#allocation2 + $0x68] sm:$0xff]
    %v154 = vld [vmem:[#allocation2 + $0x70] sm:$0xff]
    %v155 = vld [vmem:[#allocation2 + $0x78] sm:$0xff]
    %v156 = vld [vmem:[%s4] sm:$0x1]
    %v158 = vlaneseq
    %v159 = vshrl.u32 %v158, 7
    %v160 = vsub.s32 0, %v159
    %v161 = vrot.slane %v156, %v160
    %163 = vmatprep.subr.mxu0 0.0
    %164 = vmatpush1.msra.mxu0 %v140
    %165 = vmatprep.subr.mxu0 0.0
    %166 = vmatpush1.msra.mxu0 %v141
    %167 = vmatprep.subr.mxu0 0.0
    %168 = vmatpush1.msra.mxu0 %v142
    %169 = vmatprep.subr.mxu0 0.0
    %170 = vmatpush1.msra.mxu0 %v143
    %171 = vmatprep.subr.mxu0 0.0
    %172 = vmatpush1.msra.mxu0 %v144
    %173 = vmatprep.subr.mxu0 0.0
    %174 = vmatpush1.msra.mxu0 %v145
    %175 = vmatprep.subr.mxu0 0.0
    %176 = vmatpush1.msra.mxu0 %v146
    %177 = vmatprep.subr.mxu0 0.0
    %178 = vmatpush1.msra.mxu0 %v147
    %179 = vmatprep.subr.mxu0 0.0
    %180 = vmatpush1.msra.mxu0 %v148
    %181 = vmatprep.subr.mxu0 0.0
    %182 = vmatpush1.msra.mxu0 %v149
    %183 = vmatprep.subr.mxu0 0.0
    %184 = vmatpush1.msra.mxu0 %v150
    %185 = vmatprep.subr.mxu0 0.0
    %186 = vmatpush1.msra.mxu0 %v151
    %187 = vmatprep.subr.mxu0 0.0
    %188 = vmatpush1.msra.mxu0 %v152
    %189 = vmatprep.subr.mxu0 0.0
    %190 = vmatpush1.msra.mxu0 %v153
    %191 = vmatprep.subr.mxu0 0.0
    %192 = vmatpush1.msra.mxu0 %v154
    %193 = vmatprep.subr.mxu0 0.0
    %194 = vmatpush1.msra.mxu0 %v155
    %195 = vmatprep.subr.mxu0 0.0
    %196 = vmatpush1.msra.mxu0 0.0
    %197 = vmatprep.subr.mxu0 0.0
    %198 = vmatpush1.msra.mxu0 0.0
    %199 = vmatprep.subr.mxu0 0.0
    %200 = vmatpush1.msra.mxu0 0.0
    %201 = vmatprep.subr.mxu0 0.0
    %202 = vmatpush1.msra.mxu0 0.0
    %203 = vmatprep.subr.mxu0 0.0
    %204 = vmatpush1.msra.mxu0 0.0
    %205 = vmatprep.subr.mxu0 0.0
    %206 = vmatpush1.msra.mxu0 0.0
    %207 = vmatprep.subr.mxu0 0.0
    %208 = vmatpush1.msra.mxu0 0.0
    %209 = vmatprep.subr.mxu0 0.0
    %210 = vmatpush1.msra.mxu0 0.0
    %211 = vmatprep.subr.mxu0 0.0
    %212 = vmatpush1.msra.mxu0 0.0
    %213 = vmatprep.subr.mxu0 0.0
    %214 = vmatpush1.msra.mxu0 0.0
    %215 = vmatprep.subr.mxu0 0.0
    %216 = vmatpush1.msra.mxu0 0.0
    %217 = vmatprep.subr.mxu0 0.0
    %218 = vmatpush1.msra.mxu0 0.0
    %219 = vmatprep.subr.mxu0 0.0
    %220 = vmatpush1.msra.mxu0 0.0
    %221 = vmatprep.subr.mxu0 0.0
    %222 = vmatpush1.msra.mxu0 0.0
    %223 = vmatprep.subr.mxu0 0.0
    %224 = vmatpush1.msra.mxu0 0.0
    %225 = vmatprep.subr.mxu0 0.0
    %226 = vmatpush1.msra.mxu0 0.0
    %227 = vmatprep.mubr.f32.mxu0 0.0
    %228 = vmatmul.mubr.f32.gmra.mrb[0].mxu0 %v139
    %v229 = vpop.f32.mrb[0].mxu0
    %v230 = vadd.f32 %v161, %v229
    %v231 = vpop.f32.mrb[0].mxu0
    %232 = vdwg.mxu0
    %v233 = vmax.f32 %v230, 0.0
    %s234 = scalar_lea.vmem [#allocation2], 128
    %v235 = vld [vmem:[%s234] sm:$0xff]
    %v236 = vld [vmem:[%s234 + $0x8] sm:$0xff]
    %v237 = vld [vmem:[%s234 + $0x10] sm:$0xff]
    %v238 = vld [vmem:[%s234 + $0x18] sm:$0xff]
    %v239 = vld [vmem:[%s234 + $0x20] sm:$0xff]
    %v240 = vld [vmem:[%s234 + $0x28] sm:$0xff]
    %v241 = vld [vmem:[%s234 + $0x30] sm:$0xff]
    %v242 = vld [vmem:[%s234 + $0x38] sm:$0xff]
    %v243 = vld [vmem:[%s234 + $0x40] sm:$0xff]
    %v244 = vld [vmem:[%s234 + $0x48] sm:$0xff]
    %v245 = vld [vmem:[%s234 + $0x50] sm:$0xff]
    %v246 = vld [vmem:[%s234 + $0x58] sm:$0xff]
    %v247 = vld [vmem:[%s234 + $0x60] sm:$0xff]
    %v248 = vld [vmem:[%s234 + $0x68] sm:$0xff]
    %v249 = vld [vmem:[%s234 + $0x70] sm:$0xff]
    %v250 = vld [vmem:[%s234 + $0x78] sm:$0xff]
    %s251 = scalar_lea.vmem %s4, 1
    %v252 = vld [vmem:[%s251] sm:$0x1]
    %v254 = vlaneseq
    %v255 = vshrl.u32 %v254, 7
    %v256 = vsub.s32 0, %v255
    %v257 = vrot.slane %v252, %v256
    %259 = vmatprep.subr.mxu0 0.0
    %260 = vmatpush1.msra.mxu0 %v235
    %261 = vmatprep.subr.mxu0 0.0
    %262 = vmatpush1.msra.mxu0 %v236
    %263 = vmatprep.subr.mxu0 0.0
    %264 = vmatpush1.msra.mxu0 %v237
    %265 = vmatprep.subr.mxu0 0.0
    %266 = vmatpush1.msra.mxu0 %v238
    %267 = vmatprep.subr.mxu0 0.0
    %268 = vmatpush1.msra.mxu0 %v239
    %269 = vmatprep.subr.mxu0 0.0
    %270 = vmatpush1.msra.mxu0 %v240
    %271 = vmatprep.subr.mxu0 0.0
    %272 = vmatpush1.msra.mxu0 %v241
    %273 = vmatprep.subr.mxu0 0.0
    %274 = vmatpush1.msra.mxu0 %v242
    %275 = vmatprep.subr.mxu0 0.0
    %276 = vmatpush1.msra.mxu0 %v243
    %277 = vmatprep.subr.mxu0 0.0
    %278 = vmatpush1.msra.mxu0 %v244
    %279 = vmatprep.subr.mxu0 0.0
    %280 = vmatpush1.msra.mxu0 %v245
    %281 = vmatprep.subr.mxu0 0.0
    %282 = vmatpush1.msra.mxu0 %v246
    %283 = vmatprep.subr.mxu0 0.0
    %284 = vmatpush1.msra.mxu0 %v247
    %285 = vmatprep.subr.mxu0 0.0
    %286 = vmatpush1.msra.mxu0 %v248
    %287 = vmatprep.subr.mxu0 0.0
    %288 = vmatpush1.msra.mxu0 %v249
    %289 = vmatprep.subr.mxu0 0.0
    %290 = vmatpush1.msra.mxu0 %v250
    %291 = vmatprep.subr.mxu0 0.0
    %292 = vmatpush1.msra.mxu0 0.0
    %293 = vmatprep.subr.mxu0 0.0
    %294 = vmatpush1.msra.mxu0 0.0
    %295 = vmatprep.subr.mxu0 0.0
    %296 = vmatpush1.msra.mxu0 0.0
    %297 = vmatprep.subr.mxu0 0.0
    %298 = vmatpush1.msra.mxu0 0.0
    %299 = vmatprep.subr.mxu0 0.0
    %300 = vmatpush1.msra.mxu0 0.0
    %301 = vmatprep.subr.mxu0 0.0
    %302 = vmatpush1.msra.mxu0 0.0
    %303 = vmatprep.subr.mxu0 0.0
    %304 = vmatpush1.msra.mxu0 0.0
    %305 = vmatprep.subr.mxu0 0.0
    %306 = vmatpush1.msra.mxu0 0.0
    %307 = vmatprep.subr.mxu0 0.0
    %308 = vmatpush1.msra.mxu0 0.0
    %309 = vmatprep.subr.mxu0 0.0
    %310 = vmatpush1.msra.mxu0 0.0
    %311 = vmatprep.subr.mxu0 0.0
    %312 = vmatpush1.msra.mxu0 0.0
    %313 = vmatprep.subr.mxu0 0.0
    %314 = vmatpush1.msra.mxu0 0.0
    %315 = vmatprep.subr.mxu0 0.0
    %316 = vmatpush1.msra.mxu0 0.0
    %317 = vmatprep.subr.mxu0 0.0
    %318 = vmatpush1.msra.mxu0 0.0
    %319 = vmatprep.subr.mxu0 0.0
    %320 = vmatpush1.msra.mxu0 0.0
    %321 = vmatprep.subr.mxu0 0.0
    %322 = vmatpush1.msra.mxu0 0.0
    %323 = vmatprep.mubr.f32.mxu0 0.0
    %324 = vmatmul.mubr.f32.gmra.mrb[0].mxu0 %v233
    %v325 = vpop.f32.mrb[0].mxu0
    %v326 = vadd.f32 %v257, %v325
    %v327 = vpop.f32.mrb[0].mxu0
    %328 = vdwg.mxu0
    %v329 = vmax.f32 %v326, 0.0
    %v330 = vadd.f32 %v329, %v233
    %s331 = scalar_lea.vmem [#allocation2], 256
    %v332 = vld [vmem:[%s331] sm:$0xff]
    %v333 = vld [vmem:[%s331 + $0x8] sm:$0xff]
    %v334 = vld [vmem:[%s331 + $0x10] sm:$0xff]
    %v335 = vld [vmem:[%s331 + $0x18] sm:$0xff]
    %v336 = vld [vmem:[%s331 + $0x20] sm:$0xff]
    %v337 = vld [vmem:[%s331 + $0x28] sm:$0xff]
    %v338 = vld [vmem:[%s331 + $0x30] sm:$0xff]
    %v339 = vld [vmem:[%s331 + $0x38] sm:$0xff]
    %v340 = vld [vmem:[%s331 + $0x40] sm:$0xff]
    %v341 = vld [vmem:[%s331 + $0x48] sm:$0xff]
    %v342 = vld [vmem:[%s331 + $0x50] sm:$0xff]
    %v343 = vld [vmem:[%s331 + $0x58] sm:$0xff]
    %v344 = vld [vmem:[%s331 + $0x60] sm:$0xff]
    %v345 = vld [vmem:[%s331 + $0x68] sm:$0xff]
    %v346 = vld [vmem:[%s331 + $0x70] sm:$0xff]
    %v347 = vld [vmem:[%s331 + $0x78] sm:$0xff]
    %s348 = scalar_lea.vmem %s4, 2
    %v349 = vld [vmem:[%s348] sm:$0x1]
    %v351 = vlaneseq
    %v352 = vshrl.u32 %v351, 7
    %v353 = vsub.s32 0, %v352
    %v354 = vrot.slane %v349, %v353
    %356 = vmatprep.subr.mxu0 0.0
    %357 = vmatpush1.msra.mxu0 %v332
    %358 = vmatprep.subr.mxu0 0.0
    %359 = vmatpush1.msra.mxu0 %v333
    %360 = vmatprep.subr.mxu0 0.0
    %361 = vmatpush1.msra.mxu0 %v334
    %362 = vmatprep.subr.mxu0 0.0
    %363 = vmatpush1.msra.mxu0 %v335
    %364 = vmatprep.subr.mxu0 0.0
    %365 = vmatpush1.msra.mxu0 %v336
    %366 = vmatprep.subr.mxu0 0.0
    %367 = vmatpush1.msra.mxu0 %v337
    %368 = vmatprep.subr.mxu0 0.0
    %369 = vmatpush1.msra.mxu0 %v338
    %370 = vmatprep.subr.mxu0 0.0
    %371 = vmatpush1.msra.mxu0 %v339
    %372 = vmatprep.subr.mxu0 0.0
    %373 = vmatpush1.msra.mxu0 %v340
    %374 = vmatprep.subr.mxu0 0.0
    %375 = vmatpush1.msra.mxu0 %v341
    %376 = vmatprep.subr.mxu0 0.0
    %377 = vmatpush1.msra.mxu0 %v342
    %378 = vmatprep.subr.mxu0 0.0
    %379 = vmatpush1.msra.mxu0 %v343
    %380 = vmatprep.subr.mxu0 0.0
    %381 = vmatpush1.msra.mxu0 %v344
    %382 = vmatprep.subr.mxu0 0.0
    %383 = vmatpush1.msra.mxu0 %v345
    %384 = vmatprep.subr.mxu0 0.0
    %385 = vmatpush1.msra.mxu0 %v346
    %386 = vmatprep.subr.mxu0 0.0
    %387 = vmatpush1.msra.mxu0 %v347
    %388 = vmatprep.subr.mxu0 0.0
    %389 = vmatpush1.msra.mxu0 0.0
    %390 = vmatprep.subr.mxu0 0.0
    %391 = vmatpush1.msra.mxu0 0.0
    %392 = vmatprep.subr.mxu0 0.0
    %393 = vmatpush1.msra.mxu0 0.0
    %394 = vmatprep.subr.mxu0 0.0
    %395 = vmatpush1.msra.mxu0 0.0
    %396 = vmatprep.subr.mxu0 0.0
    %397 = vmatpush1.msra.mxu0 0.0
    %398 = vmatprep.subr.mxu0 0.0
    %399 = vmatpush1.msra.mxu0 0.0
    %400 = vmatprep.subr.mxu0 0.0
    %401 = vmatpush1.msra.mxu0 0.0
    %402 = vmatprep.subr.mxu0 0.0
    %403 = vmatpush1.msra.mxu0 0.0
    %404 = vmatprep.subr.mxu0 0.0
    %405 = vmatpush1.msra.mxu0 0.0
    %406 = vmatprep.subr.mxu0 0.0
    %407 = vmatpush1.msra.mxu0 0.0
    %408 = vmatprep.subr.mxu0 0.0
    %409 = vmatpush1.msra.mxu0 0.0
    %410 = vmatprep.subr.mxu0 0.0
    %411 = vmatpush1.msra.mxu0 0.0
    %412 = vmatprep.subr.mxu0 0.0
    %413 = vmatpush1.msra.mxu0 0.0
    %414 = vmatprep.subr.mxu0 0.0
    %415 = vmatpush1.msra.mxu0 0.0
    %416 = vmatprep.subr.mxu0 0.0
    %417 = vmatpush1.msra.mxu0 0.0
    %418 = vmatprep.subr.mxu0 0.0
    %419 = vmatpush1.msra.mxu0 0.0
    %420 = vmatprep.mubr.f32.mxu0 0.0
    %421 = vmatmul.mubr.f32.gmra.mrb[0].mxu0 %v330
    %v422 = vpop.f32.mrb[0].mxu0
    %v423 = vadd.f32 %v354, %v422
    %v424 = vpop.f32.mrb[0].mxu0
    %425 = vdwg.mxu0
    %v426 = vmax.f32 %v423, 0.0
    %v427 = vadd.f32 %v426, %v330
    %s428 = scalar_lea.vmem [#allocation2], 384
    %v429 = vld [vmem:[%s428] sm:$0xff]
    %v430 = vld [vmem:[%s428 + $0x8] sm:$0xff]
    %v431 = vld [vmem:[%s428 + $0x10] sm:$0xff]
    %v432 = vld [vmem:[%s428 + $0x18] sm:$0xff]
    %v433 = vld [vmem:[%s428 + $0x20] sm:$0xff]
    %v434 = vld [vmem:[%s428 + $0x28] sm:$0xff]
    %v435 = vld [vmem:[%s428 + $0x30] sm:$0xff]
    %v436 = vld [vmem:[%s428 + $0x38] sm:$0xff]
    %v437 = vld [vmem:[%s428 + $0x40] sm:$0xff]
    %v438 = vld [vmem:[%s428 + $0x48] sm:$0xff]
    %v439 = vld [vmem:[%s428 + $0x50] sm:$0xff]
    %v440 = vld [vmem:[%s428 + $0x58] sm:$0xff]
    %v441 = vld [vmem:[%s428 + $0x60] sm:$0xff]
    %v442 = vld [vmem:[%s428 + $0x68] sm:$0xff]
    %v443 = vld [vmem:[%s428 + $0x70] sm:$0xff]
    %v444 = vld [vmem:[%s428 + $0x78] sm:$0xff]
    %s445 = scalar_lea.vmem %s4, 3
    %v446 = vld [vmem:[%s445] sm:$0x1]
    %v448 = vlaneseq
    %v449 = vshrl.u32 %v448, 7
    %v450 = vsub.s32 0, %v449
    %v451 = vrot.slane %v446, %v450
    %453 = vmatprep.subr.mxu0 0.0
    %454 = vmatpush1.msra.mxu0 %v429
    %455 = vmatprep.subr.mxu0 0.0
    %456 = vmatpush1.msra.mxu0 %v430
    %457 = vmatprep.subr.mxu0 0.0
    %458 = vmatpush1.msra.mxu0 %v431
    %459 = vmatprep.subr.mxu0 0.0
    %460 = vmatpush1.msra.mxu0 %v432
    %461 = vmatprep.subr.mxu0 0.0
    %462 = vmatpush1.msra.mxu0 %v433
    %463 = vmatprep.subr.mxu0 0.0
    %464 = vmatpush1.msra.mxu0 %v434
    %465 = vmatprep.subr.mxu0 0.0
    %466 = vmatpush1.msra.mxu0 %v435
    %467 = vmatprep.subr.mxu0 0.0
    %468 = vmatpush1.msra.mxu0 %v436
    %469 = vmatprep.subr.mxu0 0.0
    %470 = vmatpush1.msra.mxu0 %v437
    %471 = vmatprep.subr.mxu0 0.0
    %472 = vmatpush1.msra.mxu0 %v438
    %473 = vmatprep.subr.mxu0 0.0
    %474 = vmatpush1.msra.mxu0 %v439
    %475 = vmatprep.subr.mxu0 0.0
    %476 = vmatpush1.msra.mxu0 %v440
    %477 = vmatprep.subr.mxu0 0.0
    %478 = vmatpush1.msra.mxu0 %v441
    %479 = vmatprep.subr.mxu0 0.0
    %480 = vmatpush1.msra.mxu0 %v442
    %481 = vmatprep.subr.mxu0 0.0
    %482 = vmatpush1.msra.mxu0 %v443
    %483 = vmatprep.subr.mxu0 0.0
    %484 = vmatpush1.msra.mxu0 %v444
    %485 = vmatprep.subr.mxu0 0.0
    %486 = vmatpush1.msra.mxu0 0.0
    %487 = vmatprep.subr.mxu0 0.0
    %488 = vmatpush1.msra.mxu0 0.0
    %489 = vmatprep.subr.mxu0 0.0
    %490 = vmatpush1.msra.mxu0 0.0
    %491 = vmatprep.subr.mxu0 0.0
    %492 = vmatpush1.msra.mxu0 0.0
    %493 = vmatprep.subr.mxu0 0.0
    %494 = vmatpush1.msra.mxu0 0.0
    %495 = vmatprep.subr.mxu0 0.0
    %496 = vmatpush1.msra.mxu0 0.0
    %497 = vmatprep.subr.mxu0 0.0
    %498 = vmatpush1.msra.mxu0 0.0
    %499 = vmatprep.subr.mxu0 0.0
    %500 = vmatpush1.msra.mxu0 0.0
    %501 = vmatprep.subr.mxu0 0.0
    %502 = vmatpush1.msra.mxu0 0.0
    %503 = vmatprep.subr.mxu0 0.0
    %504 = vmatpush1.msra.mxu0 0.0
    %505 = vmatprep.subr.mxu0 0.0
    %506 = vmatpush1.msra.mxu0 0.0
    %507 = vmatprep.subr.mxu0 0.0
    %508 = vmatpush1.msra.mxu0 0.0
    %509 = vmatprep.subr.mxu0 0.0
    %510 = vmatpush1.msra.mxu0 0.0
    %511 = vmatprep.subr.mxu0 0.0
    %512 = vmatpush1.msra.mxu0 0.0
    %513 = vmatprep.subr.mxu0 0.0
    %514 = vmatpush1.msra.mxu0 0.0
    %515 = vmatprep.subr.mxu0 0.0
    %516 = vmatpush1.msra.mxu0 0.0
    %517 = vmatprep.mubr.f32.mxu0 0.0
    %518 = vmatmul.mubr.f32.gmra.mrb[0].mxu0 %v427
    %v519 = vpop.f32.mrb[0].mxu0
    %v520 = vadd.f32 %v451, %v519
    %v521 = vpop.f32.mrb[0].mxu0
    %522 = vdwg.mxu0
    %v523 = vmax.f32 %v520, 0.0
    %v524 = vadd.f32 %v523, %v427
    %v525 = vld [vmem:[#allocation5] sm:$0xff]
    %v526 = vld [vmem:[#allocation5 + $0x8] sm:$0xff]
    %v527 = vld [vmem:[#allocation5 + $0x10] sm:$0xff]
    %v528 = vld [vmem:[#allocation5 + $0x18] sm:$0xff]
    %v529 = vld [vmem:[#allocation5 + $0x20] sm:$0xff]
    %v530 = vld [vmem:[#allocation5 + $0x28] sm:$0xff]
    %v531 = vld [vmem:[#allocation5 + $0x30] sm:$0xff]
    %v532 = vld [vmem:[#allocation5 + $0x38] sm:$0xff]
    %v533 = vld [vmem:[#allocation5 + $0x40] sm:$0xff]
    %v534 = vld [vmem:[#allocation5 + $0x48] sm:$0xff]
    %v535 = vld [vmem:[#allocation5 + $0x50] sm:$0xff]
    %v536 = vld [vmem:[#allocation5 + $0x58] sm:$0xff]
    %v537 = vld [vmem:[#allocation5 + $0x60] sm:$0xff]
    %v538 = vld [vmem:[#allocation5 + $0x68] sm:$0xff]
    %v539 = vld [vmem:[#allocation5 + $0x70] sm:$0xff]
    %v540 = vld [vmem:[#allocation5 + $0x78] sm:$0xff]
    %v541 = vld [vmem:[%s6] sm:$0x1]
    %v543 = vlaneseq
    %v544 = vshrl.u32 %v543, 7
    %v545 = vsub.s32 0, %v544
    %v546 = vrot.slane %v541, %v545
    %548 = vmatprep.subr.mxu0 0.0
    %549 = vmatpush1.msra.mxu0 %v525
    %550 = vmatprep.subr.mxu0 0.0
    %551 = vmatpush1.msra.mxu0 %v526
    %552 = vmatprep.subr.mxu0 0.0
    %553 = vmatpush1.msra.mxu0 %v527
    %554 = vmatprep.subr.mxu0 0.0
    %555 = vmatpush1.msra.mxu0 %v528
    %556 = vmatprep.subr.mxu0 0.0
    %557 = vmatpush1.msra.mxu0 %v529
    %558 = vmatprep.subr.mxu0 0.0
    %559 = vmatpush1.msra.mxu0 %v530
    %560 = vmatprep.subr.mxu0 0.0
    %561 = vmatpush1.msra.mxu0 %v531
    %562 = vmatprep.subr.mxu0 0.0
    %563 = vmatpush1.msra.mxu0 %v532
    %564 = vmatprep.subr.mxu0 0.0
    %565 = vmatpush1.msra.mxu0 %v533
    %566 = vmatprep.subr.mxu0 0.0
    %567 = vmatpush1.msra.mxu0 %v534
    %568 = vmatprep.subr.mxu0 0.0
    %569 = vmatpush1.msra.mxu0 %v535
    %570 = vmatprep.subr.mxu0 0.0
    %571 = vmatpush1.msra.mxu0 %v536
    %572 = vmatprep.subr.mxu0 0.0
    %573 = vmatpush1.msra.mxu0 %v537
    %574 = vmatprep.subr.mxu0 0.0
    %575 = vmatpush1.msra.mxu0 %v538
    %576 = vmatprep.subr.mxu0 0.0
    %577 = vmatpush1.msra.mxu0 %v539
    %578 = vmatprep.subr.mxu0 0.0
    %579 = vmatpush1.msra.mxu0 %v540
    %580 = vmatprep.subr.mxu0 0.0
    %581 = vmatpush1.msra.mxu0 0.0
    %582 = vmatprep.subr.mxu0 0.0
    %583 = vmatpush1.msra.mxu0 0.0
    %584 = vmatprep.subr.mxu0 0.0
    %585 = vmatpush1.msra.mxu0 0.0
    %586 = vmatprep.subr.mxu0 0.0
    %587 = vmatpush1.msra.mxu0 0.0
    %588 = vmatprep.subr.mxu0 0.0
    %589 = vmatpush1.msra.mxu0 0.0
    %590 = vmatprep.subr.mxu0 0.0
    %591 = vmatpush1.msra.mxu0 0.0
    %592 = vmatprep.subr.mxu0 0.0
    %593 = vmatpush1.msra.mxu0 0.0
    %594 = vmatprep.subr.mxu0 0.0
    %595 = vmatpush1.msra.mxu0 0.0
    %596 = vmatprep.subr.mxu0 0.0
    %597 = vmatpush1.msra.mxu0 0.0
    %598 = vmatprep.subr.mxu0 0.0
    %599 = vmatpush1.msra.mxu0 0.0
    %600 = vmatprep.subr.mxu0 0.0
    %601 = vmatpush1.msra.mxu0 0.0
    %602 = vmatprep.subr.mxu0 0.0
    %603 = vmatpush1.msra.mxu0 0.0
    %604 = vmatprep.subr.mxu0 0.0
    %605 = vmatpush1.msra.mxu0 0.0
    %606 = vmatprep.subr.mxu0 0.0
    %607 = vmatpush1.msra.mxu0 0.0
    %608 = vmatprep.subr.mxu0 0.0
    %609 = vmatpush1.msra.mxu0 0.0
    %610 = vmatprep.subr.mxu0 0.0
    %611 = vmatpush1.msra.mxu0 0.0
    %612 = vmatprep.mubr.f32.mxu0 0.0
    %613 = vmatmul.mubr.f32.gmra.mrb[0].mxu0 %v524
    %v614 = vpop.f32.mrb[0].mxu0
    %v615 = vadd.f32 %v546, %v614
    %v616 = vpop.f32.mrb[0].mxu0
    %617 = vdwg.mxu0
    %v618 = vxor.u32 %v615, 2147483648
    %v619 = vmul.f32 %v618, 1.442695
    %v620 = vpow.pop %v619
    %v621 = vadd.f32 %v620, 1.0
    %v622 = vrcp.pop %v621
    %v623 = vmul.f32 1.0, %v622
    %624 = vst [vmem:[#allocation7] sm:$0xf] %v623
    // Predicated region
    $region38: #{_forward_impl.1} parent=1 // pred_check
      _
    $region39: #{_forward_impl.1} parent=1 // pred_check_branch
      %626 = sbr.rel (0) target = $region41
    $region40: #{_forward_impl.1} parent=1 // pred_region
      %s628 = ssub.s32 64, 64
      %629 = vsyncadd [#allocation4], %s628
      %s631 = sshll.u32 [#allocation7], 4
      %s632 = int_to_ptr.vmem [resolvable:$true] %s631
      %634 = dma.vmem_to_hbm [thread:$0]  %s632, 64, %s7, [#allocation4]
    $region41: #{_forward_impl.1} parent=1 // pred_fallthru
      _
    // Predicated region
    $region42: #{_forward_impl.1} parent=1 // pred_check
      _
    $region43: #{_forward_impl.1} parent=1 // pred_check_branch
      %636 = sbr.rel (0) target = $region45
    $region44: #{_forward_impl.1} parent=1 // pred_region
      %637 = dma.done [#allocation4], 64
    $region45: #{_forward_impl.1} parent=1 // pred_fallthru
      _
    %638 = vsyncpa [#allocation3], 1
    %639 = vsyncpa [#allocation6], 1
    %640 = vsyncpa [#allocation4], 1

</llo_original>
